<compile_context>
chip_gen: v6e
topology: v6e:2x2x1
jax: 0.10.0
libtpu: 0.0.40
codegen_flags: <defaults>
</compile_context>

<pallas_src>
import jax
import jax.numpy as jnp
from jax.experimental import pallas as pl
from jax.experimental.pallas import tpu as pltpu

MAT_DIFF_LOSS_SCALE = 0.001


def _make_kernel(B, TB, C, D, feature_transform, scale):
    """Builds the fused (CE [+ regularizer]) kernel for one chunk layout."""
    inv_b = 1.0 / float(B)
    scale = float(scale)

    def kernel(*refs):
        if feature_transform:
            logits_ref, target_ref, trans_ref, out_ref = refs
        else:
            logits_ref, target_ref, out_ref = refs

        chunk = pl.program_id(0)

        # Row-validity mask (global row index < B).  The last chunk of a
        # ragged batch sees an implicitly padded block with unspecified data,
        # so masking must be NaN-safe (jnp.where, never multiply-by-mask).
        row = jax.lax.broadcasted_iota(jnp.int32, (TB, 1), 0) + chunk * TB
        valid = row < B                                     # (TB, 1) bool

        # ---- cross entropy: native-dtype stream, f32 VPU/EUP math ----------
        logits = logits_ref[...].astype(jnp.float32)        # (TB, C)
        tgt = target_ref[...]                               # (TB, 1) int32
        m = jnp.max(logits, axis=-1, keepdims=True)
        lse = jnp.log(jnp.sum(jnp.exp(logits - m), axis=-1, keepdims=True)) + m
        col = jax.lax.broadcasted_iota(jnp.int32, (TB, C), 1)
        tgt_logit = jnp.sum(jnp.where(col == tgt, logits, 0.0),
                            axis=-1, keepdims=True)         # (TB, 1)
        ce_sum = jnp.sum(jnp.where(valid, lse - tgt_logit, 0.0))

        partial = ce_sum * inv_b

        # ---- feature-transform regularizer: ||T T^T - I||_F per sample -----
        if feature_transform:
            t = trans_ref[...]                              # (TB, D, D) native
            # Batched T @ T^T on the MXU (contract last dim of both operands,
            # same orientation as q.k^T in attention); f32 accumulation.
            gram = jax.lax.dot_general(
                t, t, (((2,), (2,)), ((0,), (0,))),
                preferred_element_type=jnp.float32)         # (TB, D, D) f32
            ii = jax.lax.broadcasted_iota(jnp.int32, (D, D), 0)
            jj = jax.lax.broadcasted_iota(jnp.int32, (D, D), 1)
            eye = (ii == jj).astype(jnp.float32)            # (D, D)
            diff = gram - eye[None, :, :]
            fro_sq = jnp.sum(jnp.sum(diff * diff, axis=2),
                             axis=1, keepdims=True)         # (TB, 1)
            fro = jnp.sqrt(fro_sq)
            reg_sum = jnp.sum(jnp.where(valid, fro, 0.0))
            partial = partial + reg_sum * (scale * inv_b)

        # Lane-dense, unmasked store of this chunk's contribution; wrapper
        # reads [0, 0] of each chunk tile and sums.
        out_ref[...] = jnp.broadcast_to(
            partial.astype(jnp.float32), (1, 8, 128))

    return kernel


def pointnet_butterfly_loss(logits, target, trans_feat=None,
                            feature_transform=True,
                            mat_diff_loss_scale=MAT_DIFF_LOSS_SCALE,
                            max_rows_per_step=None):
    """logits: (B, C) float, target: (B,) int, trans_feat: (B, D, D) float."""
    B, C = logits.shape
    target2d = target.astype(jnp.int32).reshape(B, 1)
    D = int(trans_feat.shape[1]) if feature_transform else 0

    # --- rows per chunk: whole batch if it fits, else big VMEM-friendly tiles
    max_tb = 512 if max_rows_per_step is None else int(max_rows_per_step)
    if feature_transform and D > 0:
        t_item = jnp.dtype(trans_feat.dtype).itemsize
        # per-row VMEM: double-buffered native trans block + f32 gram/diff
        # intermediates.  Keep total well under v7x's 32 MiB scoped default.
        per_row = D * D * (2 * t_item + 3 * 4)
        cap = (24 * 1024 * 1024) // max(1, per_row)
        cap = max(8, (cap // 8) * 8)
        max_tb = min(max_tb, cap)

    if B <= max_tb:
        TB, num_chunks = B, 1
    else:
        TB = max(8, (max_tb // 8) * 8)
        num_chunks = -(-B // TB)   # cdiv; ragged last block handled in-kernel
                                   # (no jnp.pad HBM rewrite of the inputs)

    in_specs = [
        pl.BlockSpec((TB, C), lambda c: (c, 0)),
        pl.BlockSpec((TB, 1), lambda c: (c, 0)),
    ]
    args = [logits, target2d]
    if feature_transform:
        in_specs.append(pl.BlockSpec((TB, D, D), lambda c: (c, 0, 0)))
        args.append(trans_feat)

    # Explicit VMEM budget: double-buffered input/output blocks + f32
    # gram/diff intermediates + headroom.
    l_item = jnp.dtype(logits.dtype).itemsize
    blk = TB * C * l_item + TB * 4 + 8 * 128 * 4
    if feature_transform:
        blk += TB * D * D * jnp.dtype(trans_feat.dtype).itemsize
    est = 2 * blk + (3 * TB * D * D * 4 if feature_transform else 0) + (4 << 20)
    vmem_limit = int(min(max(est, 16 << 20), 48 << 20))

    kernel = _make_kernel(B, TB, C, D, feature_transform, mat_diff_loss_scale)

    out = pl.pallas_call(
        kernel,
        out_shape=jax.ShapeDtypeStruct((num_chunks, 8, 128), jnp.float32),
        grid_spec=pltpu.PrefetchScalarGridSpec(
            num_scalar_prefetch=0,
            grid=(num_chunks,),
            in_specs=in_specs,
            out_specs=pl.BlockSpec((1, 8, 128), lambda c: (c, 0, 0)),
        ),
        compiler_params=pltpu.CompilerParams(
            dimension_semantics=("parallel",),
            vmem_limit_bytes=vmem_limit),
    )(*args)

    # Tiny final reduction over per-chunk partials (already /B and scaled).
    return jnp.sum(out[:, 0, 0])


def _reference(logits, target, trans_feat, feature_transform,
               scale=MAT_DIFF_LOSS_SCALE):
    # pure-JAX reference matching the PyTorch semantics (f32 math)
    logits = logits.astype(jnp.float32)
    lse = jax.nn.logsumexp(logits, axis=-1)
    tgt = jnp.take_along_axis(
        logits, target[:, None].astype(jnp.int32), axis=1)[:, 0]
    ce = jnp.mean(lse - tgt)
    if not feature_transform:
        return ce
    t = trans_feat.astype(jnp.float32)
    gram = jnp.einsum("bij,bkj->bik", t, t)
    eye = jnp.eye(t.shape[1], dtype=jnp.float32)[None]
    reg = jnp.mean(jnp.sqrt(jnp.sum((gram - eye) ** 2, axis=(1, 2))))
    return ce + reg * scale


if __name__ == "__main__":
    key = jax.random.PRNGKey(0)
    k1, k2, k3 = jax.random.split(key, 3)

    # Case 1: typical small PointNet-like shapes -> single fused grid step.
    B, C, D = 4, 16, 64
    logits = jax.random.normal(k1, (B, C), dtype=jnp.float32)
    target = jax.random.randint(k2, (B,), 0, C, dtype=jnp.int32)
    trans_feat = jax.random.normal(k3, (B, D, D), dtype=jnp.float32) * 0.1

    loss = jax.block_until_ready(
        pointnet_butterfly_loss(logits, target, trans_feat,
                                feature_transform=True))
    ref = _reference(logits, target, trans_feat, True)
    assert jnp.allclose(loss, ref, rtol=1e-5, atol=1e-5), (loss, ref)

    # Case 2: feature_transform=False -> CE-only kernel (no trans_feat stream).
    loss_ce = jax.block_until_ready(
        pointnet_butterfly_loss(logits, target, trans_feat,
                                feature_transform=False))
    ref_ce = _reference(logits, target, trans_feat, False)
    assert jnp.allclose(loss_ce, ref_ce, rtol=1e-5, atol=1e-5), (loss_ce, ref_ce)

    # Case 3: ragged chunked path (B=20, TB=8 -> 3 chunks, implicit padding
    # of the last block, in-kernel masking, "parallel" chunk axis).
    k4, k5, k6 = jax.random.split(jax.random.PRNGKey(1), 3)
    B2, C2, D2 = 20, 16, 32
    logits2 = jax.random.normal(k4, (B2, C2), dtype=jnp.float32)
    target2 = jax.random.randint(k5, (B2,), 0, C2, dtype=jnp.int32)
    trans2 = jax.random.normal(k6, (B2, D2, D2), dtype=jnp.float32) * 0.1
    loss2 = jax.block_until_ready(
        pointnet_butterfly_loss(logits2, target2, trans2,
                                feature_transform=True, max_rows_per_step=8))
    ref2 = _reference(logits2, target2, trans2, True)
    assert jnp.allclose(loss2, ref2, rtol=1e-5, atol=1e-5), (loss2, ref2)

    # Case 4: native bf16 streaming (halved HBM traffic) -- bf16 feeds the MXU
    # directly, f32 math in-kernel; compare against an f32 reference of the
    # same bf16-quantized values with a loose tolerance.
    logits_bf = logits.astype(jnp.bfloat16)
    trans_bf = trans_feat.astype(jnp.bfloat16)
    loss_bf = jax.block_until_ready(
        pointnet_butterfly_loss(logits_bf, target, trans_bf,
                                feature_transform=True))
    ref_bf = _reference(logits_bf.astype(jnp.float32), target,
                        trans_bf.astype(jnp.float32), True)
    assert jnp.allclose(loss_bf, ref_bf, rtol=5e-3, atol=5e-3), (loss_bf, ref_bf)

    print("KERNEL_OK")
</pallas_src>

<mosaic_0001>
module attributes {stable_mosaic.version = 11 : i64} {
  func.func @kernel(%arg0: i32, %arg1: memref<4x16xf32, #tpu.memory_space<vmem>>, %arg2: memref<4x1xi32, #tpu.memory_space<vmem>>, %arg3: memref<4x64x64xf32, #tpu.memory_space<vmem>>, %arg4: memref<1x8x128xf32, #tpu.memory_space<vmem>>) attributes {dimension_semantics = [#tpu.dimension_semantics<parallel>], iteration_bounds = array<i64: 1>, scalar_prefetch = 0 : i64, scratch_operands = 0 : i64, tpu.core_type = #tpu.core_type<tc>, window_params = [{transform_indices = @transform_0, window_bounds = array<i64: 4, 16>}, {transform_indices = @transform_1, window_bounds = array<i64: 4, 1>}, {transform_indices = @transform_2, window_bounds = array<i64: 4, 64, 64>}, {transform_indices = @transform_3, window_bounds = array<i64: 1, 8, 128>}]} {
    %0 = tpu.iota {dimensions = array<i32: 0>} : vector<4x1xi32>
    %c4_i32 = arith.constant 4 : i32
    %1 = arith.muli %arg0, %c4_i32 : i32
    %2 = vector.broadcast %1 : i32 to vector<4x1xi32>
    %3 = arith.addi %0, %2 : vector<4x1xi32>
    %c4_i32_0 = arith.constant 4 : i32
    %4 = vector.broadcast %c4_i32_0 : i32 to vector<4x1xi32>
    %5 = arith.cmpi slt, %3, %4 : vector<4x1xi32>
    %c0 = arith.constant 0 : index
    %c0_1 = arith.constant 0 : index
    %6 = vector.load %arg1[%c0, %c0_1] : memref<4x16xf32, #tpu.memory_space<vmem>>, vector<4x16xf32>
    %c0_2 = arith.constant 0 : index
    %c0_3 = arith.constant 0 : index
    %7 = vector.load %arg2[%c0_2, %c0_3] : memref<4x1xi32, #tpu.memory_space<vmem>>, vector<4x1xi32>
    %cst = arith.constant dense<0xFF800000> : vector<4xf32>
    %8 = vector.multi_reduction <maximumf>, %6, %cst [1] : vector<4x16xf32> to vector<4xf32>
    %9 = vector.shape_cast %8 : vector<4xf32> to vector<4x1xf32>
    %10 = vector.broadcast %9 : vector<4x1xf32> to vector<4x16xf32>
    %11 = arith.subf %6, %10 : vector<4x16xf32>
    %12 = math.exp %11 : vector<4x16xf32>
    %cst_4 = arith.constant dense<0.000000e+00> : vector<4xf32>
    %13 = vector.multi_reduction <add>, %12, %cst_4 [1] : vector<4x16xf32> to vector<4xf32>
    %14 = vector.shape_cast %13 : vector<4xf32> to vector<4x1xf32>
    %15 = math.log %14 : vector<4x1xf32>
    %16 = arith.addf %15, %9 : vector<4x1xf32>
    %17 = tpu.iota {dimensions = array<i32: 1>} : vector<4x16xi32>
    %18 = vector.broadcast %7 : vector<4x1xi32> to vector<4x16xi32>
    %19 = arith.cmpi eq, %17, %18 : vector<4x16xi32>
    %cst_5 = arith.constant 0.000000e+00 : f32
    %20 = vector.broadcast %cst_5 : f32 to vector<4x16xf32>
    %21 = arith.select %19, %6, %20 : vector<4x16xi1>, vector<4x16xf32>
    %cst_6 = arith.constant dense<0.000000e+00> : vector<4xf32>
    %22 = vector.multi_reduction <add>, %21, %cst_6 [1] : vector<4x16xf32> to vector<4xf32>
    %23 = vector.shape_cast %22 : vector<4xf32> to vector<4x1xf32>
    %24 = arith.subf %16, %23 : vector<4x1xf32>
    %cst_7 = arith.constant 0.000000e+00 : f32
    %25 = vector.broadcast %cst_7 : f32 to vector<4x1xf32>
    %26 = arith.select %5, %24, %25 : vector<4x1xi1>, vector<4x1xf32>
    %27 = vector.shape_cast %26 : vector<4x1xf32> to vector<1x4x1xf32>
    %cst_8 = arith.constant dense<0.000000e+00> : vector<1xf32>
    %28 = vector.multi_reduction <add>, %27, %cst_8 [1, 2] : vector<1x4x1xf32> to vector<1xf32>
    %29 = vector.shape_cast %28 : vector<1xf32> to vector<1x1x1xf32>
    %30 = vector.extract %29[0, 0, 0] : f32 from vector<1x1x1xf32>
    %cst_9 = arith.constant 2.500000e-01 : f32
    %31 = arith.mulf %30, %cst_9 : f32
    %c0_10 = arith.constant 0 : index
    %c0_11 = arith.constant 0 : index
    %c0_12 = arith.constant 0 : index
    %32 = vector.load %arg3[%c0_10, %c0_11, %c0_12] : memref<4x64x64xf32, #tpu.memory_space<vmem>>, vector<4x64x64xf32>
    %cst_13 = arith.constant dense<0.000000e+00> : vector<4x64x64xf32>
    %33 = tpu.matmul %32, %32, %cst_13 {dimension_numbers = #tpu.dot_dimension_numbers<[2], [2], [1], [1], [0, 0, 0, 1, 1, 1], [0], [0]>} : vector<4x64x64xf32>, vector<4x64x64xf32>, vector<4x64x64xf32> -> vector<4x64x64xf32>
    %34 = tpu.iota {dimensions = array<i32: 0>} : vector<64x64xi32>
    %35 = tpu.iota {dimensions = array<i32: 1>} : vector<64x64xi32>
    %36 = arith.cmpi eq, %34, %35 : vector<64x64xi32>
    %37 = arith.extui %36 : vector<64x64xi1> to vector<64x64xi32>
    %38 = arith.sitofp %37 : vector<64x64xi32> to vector<64x64xf32>
    %39 = vector.shape_cast %38 : vector<64x64xf32> to vector<1x64x64xf32>
    %40 = vector.broadcast %39 : vector<1x64x64xf32> to vector<4x64x64xf32>
    %41 = arith.subf %33, %40 : vector<4x64x64xf32>
    %42 = arith.mulf %41, %41 : vector<4x64x64xf32>
    %cst_14 = arith.constant dense<0.000000e+00> : vector<4x64xf32>
    %43 = vector.multi_reduction <add>, %42, %cst_14 [2] : vector<4x64x64xf32> to vector<4x64xf32>
    %cst_15 = arith.constant dense<0.000000e+00> : vector<4xf32>
    %44 = vector.multi_reduction <add>, %43, %cst_15 [1] : vector<4x64xf32> to vector<4xf32>
    %45 = vector.shape_cast %44 : vector<4xf32> to vector<4x1xf32>
    %46 = math.sqrt %45 : vector<4x1xf32>
    %cst_16 = arith.constant 0.000000e+00 : f32
    %47 = vector.broadcast %cst_16 : f32 to vector<4x1xf32>
    %48 = arith.select %5, %46, %47 : vector<4x1xi1>, vector<4x1xf32>
    %49 = vector.shape_cast %48 : vector<4x1xf32> to vector<1x4x1xf32>
    %cst_17 = arith.constant dense<0.000000e+00> : vector<1xf32>
    %50 = vector.multi_reduction <add>, %49, %cst_17 [1, 2] : vector<1x4x1xf32> to vector<1xf32>
    %51 = vector.shape_cast %50 : vector<1xf32> to vector<1x1x1xf32>
    %52 = vector.extract %51[0, 0, 0] : f32 from vector<1x1x1xf32>
    %cst_18 = arith.constant 2.500000e-04 : f32
    %53 = arith.mulf %52, %cst_18 : f32
    %54 = arith.addf %31, %53 : f32
    %55 = vector.broadcast %54 : f32 to vector<1x8x128xf32>
    %c0_19 = arith.constant 0 : index
    %c0_20 = arith.constant 0 : index
    %c0_21 = arith.constant 0 : index
    %56 = vector.load %arg4[%c0_19, %c0_20, %c0_21] : memref<1x8x128xf32, #tpu.memory_space<vmem>>, vector<1x8x128xf32>
    tpu.vector_store %arg4[%c0_19, %c0_20, %c0_21], %55 {strides = array<i32>} : memref<1x8x128xf32, #tpu.memory_space<vmem>>, vector<1x8x128xf32>,
    return
  }
  func.func @transform_0(%arg0: i32) -> (i32, i32) {
    %c0_i32 = arith.constant 0 : i32
    %c0_i32_0 = arith.constant 0 : i32
    return %arg0, %c0_i32 : i32, i32
  }
  func.func @transform_1(%arg0: i32) -> (i32, i32) {
    %c0_i32 = arith.constant 0 : i32
    %c0_i32_0 = arith.constant 0 : i32
    return %arg0, %c0_i32 : i32, i32
  }
  func.func @transform_2(%arg0: i32) -> (i32, i32, i32) {
    %c0_i32 = arith.constant 0 : i32
    %c0_i32_0 = arith.constant 0 : i32
    %c0_i32_1 = arith.constant 0 : i32
    return %arg0, %c0_i32, %c0_i32_0 : i32, i32, i32
  }
  func.func @transform_3(%arg0: i32) -> (i32, i32, i32) {
    %c0_i32 = arith.constant 0 : i32
    %c0_i32_0 = arith.constant 0 : i32
    %c0_i32_1 = arith.constant 0 : i32
    return %arg0, %c0_i32, %c0_i32_0 : i32, i32, i32
  }
}

</mosaic_0001>

<llo_original>
// kernel: tpu_custom_call.1
$region0: #{tpu_custom_call.1}
  #allocation0 [shape = 'u32[]', space=smem, size = 0x4, offset = 0x4, fixed_abs, tag = 'smem constant byte address 0x4 - core index']
  #allocation1 [shape = 'u32[144,128]{1,0:T(1,128)}', space=vmem, size = 0x12000, scoped, tag = 'internal scratch']
  %s0 = inlined_call_operand.vmem [shape: f32[4,16], index: 0, kind: input, shape index: {}]
  %s1 = inlined_call_operand.vmem [shape: s32[4,1], index: 1, kind: input, shape index: {}]
  %s2 = inlined_call_operand.hbm [shape: f32[4,64,64], index: 2, kind: input, shape index: {}]
  %s3 = inlined_call_operand.hbm [shape: f32[1,8,128], index: 3, kind: output, shape index: {}]
  %s4 = sld [smem:[#allocation0]]
  $region26: #{tpu_custom_call.1} parent=0
    _
  %s6 = ssub.s32 1, %s4
  %s7 = scalar_select 0, %s6, %s4
  $region1: #{tpu_custom_call.1} parent=0
    #allocation2 [shape = 'u8[131072]{0}', space=vmem, size = 0x20000, scoped, tag = 'input window, operand 2, single buffered']
    #allocation3 [shape = 's32[1]{0}', space=sflag, size = 0x4, scoped, tag = 'scoped memory for tpu_custom_call.1']
    #allocation4 [shape = 's32[1]{0}', space=sflag, size = 0x4, scoped, tag = 'scoped memory for tpu_custom_call.1']
    #allocation5 [shape = 'u8[4096]{0}', space=vmem, size = 0x1000, scoped, tag = 'output window, operand 0, single buffered']
    %8 = vsyncpa [#allocation3], 0
    %9 = vsyncpa [#allocation4], 0
    // Predicated region
    $region2: #{tpu_custom_call.1} parent=1 // pred_check
      _
    $region3: #{tpu_custom_call.1} parent=1 // pred_check_branch
      %11 = sbr.rel (0) target = $region5
    $region4: #{tpu_custom_call.1} parent=1 // pred_region
      _
    $region5: #{tpu_custom_call.1} parent=1 // pred_fallthru
      _
    // Predicated region
    $region6: #{tpu_custom_call.1} parent=1 // pred_check
      _
    $region7: #{tpu_custom_call.1} parent=1 // pred_check_branch
      %13 = sbr.rel (0) target = $region9
    $region8: #{tpu_custom_call.1} parent=1 // pred_region
      _
    $region9: #{tpu_custom_call.1} parent=1 // pred_fallthru
      _
    // Predicated region
    $region10: #{tpu_custom_call.1} parent=1 // pred_check
      _
    $region11: #{tpu_custom_call.1} parent=1 // pred_check_branch
      %15 = sbr.rel (0) target = $region13
    $region12: #{tpu_custom_call.1} parent=1 // pred_region
      %s17 = ssub.s32 4096, 4096
      %18 = vsyncadd [#allocation3], %s17
      %s19 = sshll.u32 [#allocation2], 4
      %s20 = int_to_ptr.vmem [resolvable:$true] %s19
      %25 = dma.hbm_to_vmem [thread:$0]  %s2, 4096, %s20, [#allocation3], 128, 128, 8
    $region13: #{tpu_custom_call.1} parent=1 // pred_fallthru
      _
    // Predicated region
    $region14: #{tpu_custom_call.1} parent=1 // pred_check
      _
    $region15: #{tpu_custom_call.1} parent=1 // pred_check_branch
      %27 = sbr.rel (0) target = $region17
    $region16: #{tpu_custom_call.1} parent=1 // pred_region
      %28 = dma.done [#allocation3], 4096
    $region17: #{tpu_custom_call.1} parent=1 // pred_fallthru
      _
    %v29 = vlaneseq
    %v30 = vshrl.u32 %v29, 7
    %s31 = smul.u32 0, 4
    %v32 = vstv %s31
    %v33 = vadd.s32 %v30, %v32
    %vm34 = vcmp.lt.s32.totalorder %v33, 4
    %v35 = vld [vmem:[%s0] sm:$0xf]
    %v36 = vld [vmem:[%s1] sm:$0xf]
    %vm37 = vcmask 125952
    %v38 = vsel %vm37, %v35, -inf
    %39 = vmax.xlane.f32.xlu0 %v38
    %v40 = vpop.xlane.xlu0 %39
    %v41 = vsub.f32 %v35, %v40
    %v42 = vmul.f32 %v41, 1.442695
    %v43 = vpow.pop %v42
    %v44 = vsel %vm37, %v43, 0.0
    %45 = vadd.xlane.f32.xlu0 %v44
    %v46 = vpop.xlane.xlu0 %45
    %v47 = vlog2.pop %v46
    %v48 = vmul.f32 %v47, 0.6931472
    %v49 = vadd.f32 %v48, %v40
    %v50 = vlaneseq
    %v51 = vand.u32 %v50, 127
    %52 = vset.pattern.permute.xlu0 0
    %53 = vperm.xlu0 %52, %v36
    %v54 = vpop.permute.xlu0 %53
    %vm55 = vcmp.eq.s32.totalorder %v51, %v54
    %v56 = vsel %vm55, %v35, 0.0
    %v57 = vsel %vm37, %v56, 0.0
    %58 = vadd.xlane.f32.xlu0 %v57
    %v59 = vpop.xlane.xlu0 %58
    %v60 = vsub.f32 %v49, %v59
    %v61 = vsel %vm34, %v60, 0.0
    %vm62 = vcmask 3072
    %v63 = vsel %vm62, %v61, 0.0
    %64 = vadd.xlane.f32.xlu0 %v63
    %v65 = vpop.xlane.xlu0 %64
    %v66 = vrot.slane %v65, 4
    %v67 = vadd.f32 %v65, %v66
    %v68 = vrot.slane %v67, 2
    %v69 = vadd.f32 %v67, %v68
    %v70 = vrot.slane %v69, 1
    %v71 = vadd.f32 %v69, %v70
    %s72 = vtos %v71
    %s73 = smul.f32 %s72, 0.25
    %v74 = vld [vmem:[#allocation2] sm:$0xff]
    %v75 = vld [vmem:[#allocation2 + $0x8] sm:$0xff]
    %v76 = vld [vmem:[#allocation2 + $0x10] sm:$0xff]
    %v77 = vld [vmem:[#allocation2 + $0x18] sm:$0xff]
    %v78 = vld [vmem:[#allocation2 + $0x20] sm:$0xff]
    %v79 = vld [vmem:[#allocation2 + $0x28] sm:$0xff]
    %v80 = vld [vmem:[#allocation2 + $0x30] sm:$0xff]
    %v81 = vld [vmem:[#allocation2 + $0x38] sm:$0xff]
    %v82 = vld [vmem:[#allocation2 + $0x40] sm:$0xff]
    %v83 = vld [vmem:[#allocation2 + $0x48] sm:$0xff]
    %v84 = vld [vmem:[#allocation2 + $0x50] sm:$0xff]
    %v85 = vld [vmem:[#allocation2 + $0x58] sm:$0xff]
    %v86 = vld [vmem:[#allocation2 + $0x60] sm:$0xff]
    %v87 = vld [vmem:[#allocation2 + $0x68] sm:$0xff]
    %v88 = vld [vmem:[#allocation2 + $0x70] sm:$0xff]
    %v89 = vld [vmem:[#allocation2 + $0x78] sm:$0xff]
    %v90 = vld [vmem:[#allocation2 + $0x80] sm:$0xff]
    %v91 = vld [vmem:[#allocation2 + $0x88] sm:$0xff]
    %v92 = vld [vmem:[#allocation2 + $0x90] sm:$0xff]
    %v93 = vld [vmem:[#allocation2 + $0x98] sm:$0xff]
    %v94 = vld [vmem:[#allocation2 + $0xa0] sm:$0xff]
    %v95 = vld [vmem:[#allocation2 + $0xa8] sm:$0xff]
    %v96 = vld [vmem:[#allocation2 + $0xb0] sm:$0xff]
    %v97 = vld [vmem:[#allocation2 + $0xb8] sm:$0xff]
    %v98 = vld [vmem:[#allocation2 + $0xc0] sm:$0xff]
    %v99 = vld [vmem:[#allocation2 + $0xc8] sm:$0xff]
    %v100 = vld [vmem:[#allocation2 + $0xd0] sm:$0xff]
    %v101 = vld [vmem:[#allocation2 + $0xd8] sm:$0xff]
    %v102 = vld [vmem:[#allocation2 + $0xe0] sm:$0xff]
    %v103 = vld [vmem:[#allocation2 + $0xe8] sm:$0xff]
    %v104 = vld [vmem:[#allocation2 + $0xf0] sm:$0xff]
    %v105 = vld [vmem:[#allocation2 + $0xf8] sm:$0xff]
    %vm106 = vcmask 523264
    %v108 = vsel %vm106, %v74, 0
    %v111 = vsel %vm106, %v75, 0
    %v114 = vsel %vm106, %v76, 0
    %v117 = vsel %vm106, %v77, 0
    %v120 = vsel %vm106, %v78, 0
    %v123 = vsel %vm106, %v79, 0
    %v126 = vsel %vm106, %v80, 0
    %v129 = vsel %vm106, %v81, 0
    %131 = vmatprep.subr.mxu0 0.0
    %132 = vmatpush1.xpose.msra.mxu0 0.0
    %133 = vmatprep.subr.mxu0 0.0
    %134 = vmatpush1.xpose.msra.mxu0 0.0
    %135 = vmatprep.subr.mxu0 0.0
    %136 = vmatpush1.xpose.msra.mxu0 0.0
    %137 = vmatprep.subr.mxu0 0.0
    %138 = vmatpush1.xpose.msra.mxu0 0.0
    %139 = vmatprep.subr.mxu0 0.0
    %140 = vmatpush1.xpose.msra.mxu0 0.0
    %141 = vmatprep.subr.mxu0 0.0
    %142 = vmatpush1.xpose.msra.mxu0 0.0
    %143 = vmatprep.subr.mxu0 0.0
    %144 = vmatpush1.xpose.msra.mxu0 0.0
    %145 = vmatprep.subr.mxu0 0.0
    %146 = vmatpush1.xpose.msra.mxu0 0.0
    %147 = vmatprep.subr.mxu0 0.0
    %148 = vmatpush1.xpose.msra.mxu0 %v129
    %149 = vmatprep.subr.mxu0 0.0
    %150 = vmatpush1.xpose.msra.mxu0 %v126
    %151 = vmatprep.subr.mxu0 0.0
    %152 = vmatpush1.xpose.msra.mxu0 %v123
    %153 = vmatprep.subr.mxu0 0.0
    %154 = vmatpush1.xpose.msra.mxu0 %v120
    %155 = vmatprep.subr.mxu0 0.0
    %156 = vmatpush1.xpose.msra.mxu0 %v117
    %157 = vmatprep.subr.mxu0 0.0
    %158 = vmatpush1.xpose.msra.mxu0 %v114
    %159 = vmatprep.subr.mxu0 0.0
    %160 = vmatpush1.xpose.msra.mxu0 %v111
    %161 = vmatprep.subr.mxu0 0.0
    %162 = vmatpush1.xpose.msra.mxu0 %v108
    %163 = vmatprep.subr.mxu0 0.0
    %164 = vmatpush2.xpose.msra.mxu0 0.0
    %165 = vmatprep.subr.mxu0 0.0
    %166 = vmatpush2.xpose.msra.mxu0 0.0
    %167 = vmatprep.subr.mxu0 0.0
    %168 = vmatpush2.xpose.msra.mxu0 0.0
    %169 = vmatprep.subr.mxu0 0.0
    %170 = vmatpush2.xpose.msra.mxu0 0.0
    %171 = vmatprep.subr.mxu0 0.0
    %172 = vmatpush2.xpose.msra.mxu0 0.0
    %173 = vmatprep.subr.mxu0 0.0
    %174 = vmatpush2.xpose.msra.mxu0 0.0
    %175 = vmatprep.subr.mxu0 0.0
    %176 = vmatpush2.xpose.msra.mxu0 0.0
    %177 = vmatprep.subr.mxu0 0.0
    %178 = vmatpush2.xpose.msra.mxu0 0.0
    %179 = vmatprep.subr.mxu0 0.0
    %180 = vmatpush2.xpose.msra.mxu0 0.0
    %181 = vmatprep.subr.mxu0 0.0
    %182 = vmatpush2.xpose.msra.mxu0 0.0
    %183 = vmatprep.subr.mxu0 0.0
    %184 = vmatpush2.xpose.msra.mxu0 0.0
    %185 = vmatprep.subr.mxu0 0.0
    %186 = vmatpush2.xpose.msra.mxu0 0.0
    %187 = vmatprep.subr.mxu0 0.0
    %188 = vmatpush2.xpose.msra.mxu0 0.0
    %189 = vmatprep.subr.mxu0 0.0
    %190 = vmatpush2.xpose.msra.mxu0 0.0
    %191 = vmatprep.subr.mxu0 0.0
    %192 = vmatpush2.xpose.msra.mxu0 0.0
    %193 = vmatprep.subr.mxu0 0.0
    %194 = vmatpush2.xpose.msra.mxu0 0.0
    %195 = vmatprep.mubr.f32.mxu0 0.0
    %196 = vmatmul.mubr.f32.gmra.mxu0 %v108
    %v197 = vpop.f32.mrf.mxu0
    %v198 = vadd.f32 0.0, %v197
    %v199 = vpop.f32.mrf.mxu0
    %200 = vmatprep.mubr.f32.mxu0 0.0
    %201 = vmatmul.mubr.f32.gmra.mxu0 %v111
    %v202 = vpop.f32.mrf.mxu0
    %v203 = vadd.f32 0.0, %v202
    %v204 = vpop.f32.mrf.mxu0
    %205 = vmatprep.mubr.f32.mxu0 0.0
    %206 = vmatmul.mubr.f32.gmra.mxu0 %v114
    %v207 = vpop.f32.mrf.mxu0
    %v208 = vadd.f32 0.0, %v207
    %v209 = vpop.f32.mrf.mxu0
    %210 = vmatprep.mubr.f32.mxu0 0.0
    %211 = vmatmul.mubr.f32.gmra.mxu0 %v117
    %v212 = vpop.f32.mrf.mxu0
    %v213 = vadd.f32 0.0, %v212
    %v214 = vpop.f32.mrf.mxu0
    %215 = vmatprep.mubr.f32.mxu0 0.0
    %216 = vmatmul.mubr.f32.gmra.mxu0 %v120
    %v217 = vpop.f32.mrf.mxu0
    %v218 = vadd.f32 0.0, %v217
    %v219 = vpop.f32.mrf.mxu0
    %220 = vmatprep.mubr.f32.mxu0 0.0
    %221 = vmatmul.mubr.f32.gmra.mxu0 %v123
    %v222 = vpop.f32.mrf.mxu0
    %v223 = vadd.f32 0.0, %v222
    %v224 = vpop.f32.mrf.mxu0
    %225 = vmatprep.mubr.f32.mxu0 0.0
    %226 = vmatmul.mubr.f32.gmra.mxu0 %v126
    %v227 = vpop.f32.mrf.mxu0
    %v228 = vadd.f32 0.0, %v227
    %v229 = vpop.f32.mrf.mxu0
    %230 = vmatprep.mubr.f32.mxu0 0.0
    %231 = vmatmul.mubr.f32.gmra.mxu0 %v129
    %v232 = vpop.f32.mrf.mxu0
    %v233 = vadd.f32 0.0, %v232
    %v234 = vpop.f32.mrf.mxu0
    %235 = vdwg.mxu0
    %v237 = vsel %vm106, %v82, 0
    %v240 = vsel %vm106, %v83, 0
    %v243 = vsel %vm106, %v84, 0
    %v246 = vsel %vm106, %v85, 0
    %v249 = vsel %vm106, %v86, 0
    %v252 = vsel %vm106, %v87, 0
    %v255 = vsel %vm106, %v88, 0
    %v258 = vsel %vm106, %v89, 0
    %260 = vmatprep.subr.mxu0 0.0
    %261 = vmatpush1.xpose.msra.mxu0 0.0
    %262 = vmatprep.subr.mxu0 0.0
    %263 = vmatpush1.xpose.msra.mxu0 0.0
    %264 = vmatprep.subr.mxu0 0.0
    %265 = vmatpush1.xpose.msra.mxu0 0.0
    %266 = vmatprep.subr.mxu0 0.0
    %267 = vmatpush1.xpose.msra.mxu0 0.0
    %268 = vmatprep.subr.mxu0 0.0
    %269 = vmatpush1.xpose.msra.mxu0 0.0
    %270 = vmatprep.subr.mxu0 0.0
    %271 = vmatpush1.xpose.msra.mxu0 0.0
    %272 = vmatprep.subr.mxu0 0.0
    %273 = vmatpush1.xpose.msra.mxu0 0.0
    %274 = vmatprep.subr.mxu0 0.0
    %275 = vmatpush1.xpose.msra.mxu0 0.0
    %276 = vmatprep.subr.mxu0 0.0
    %277 = vmatpush1.xpose.msra.mxu0 %v258
    %278 = vmatprep.subr.mxu0 0.0
    %279 = vmatpush1.xpose.msra.mxu0 %v255
    %280 = vmatprep.subr.mxu0 0.0
    %281 = vmatpush1.xpose.msra.mxu0 %v252
    %282 = vmatprep.subr.mxu0 0.0
    %283 = vmatpush1.xpose.msra.mxu0 %v249
    %284 = vmatprep.subr.mxu0 0.0
    %285 = vmatpush1.xpose.msra.mxu0 %v246
    %286 = vmatprep.subr.mxu0 0.0
    %287 = vmatpush1.xpose.msra.mxu0 %v243
    %288 = vmatprep.subr.mxu0 0.0
    %289 = vmatpush1.xpose.msra.mxu0 %v240
    %290 = vmatprep.subr.mxu0 0.0
    %291 = vmatpush1.xpose.msra.mxu0 %v237
    %292 = vmatprep.subr.mxu0 0.0
    %293 = vmatpush2.xpose.msra.mxu0 0.0
    %294 = vmatprep.subr.mxu0 0.0
    %295 = vmatpush2.xpose.msra.mxu0 0.0
    %296 = vmatprep.subr.mxu0 0.0
    %297 = vmatpush2.xpose.msra.mxu0 0.0
    %298 = vmatprep.subr.mxu0 0.0
    %299 = vmatpush2.xpose.msra.mxu0 0.0
    %300 = vmatprep.subr.mxu0 0.0
    %301 = vmatpush2.xpose.msra.mxu0 0.0
    %302 = vmatprep.subr.mxu0 0.0
    %303 = vmatpush2.xpose.msra.mxu0 0.0
    %304 = vmatprep.subr.mxu0 0.0
    %305 = vmatpush2.xpose.msra.mxu0 0.0
    %306 = vmatprep.subr.mxu0 0.0
    %307 = vmatpush2.xpose.msra.mxu0 0.0
    %308 = vmatprep.subr.mxu0 0.0
    %309 = vmatpush2.xpose.msra.mxu0 0.0
    %310 = vmatprep.subr.mxu0 0.0
    %311 = vmatpush2.xpose.msra.mxu0 0.0
    %312 = vmatprep.subr.mxu0 0.0
    %313 = vmatpush2.xpose.msra.mxu0 0.0
    %314 = vmatprep.subr.mxu0 0.0
    %315 = vmatpush2.xpose.msra.mxu0 0.0
    %316 = vmatprep.subr.mxu0 0.0
    %317 = vmatpush2.xpose.msra.mxu0 0.0
    %318 = vmatprep.subr.mxu0 0.0
    %319 = vmatpush2.xpose.msra.mxu0 0.0
    %320 = vmatprep.subr.mxu0 0.0
    %321 = vmatpush2.xpose.msra.mxu0 0.0
    %322 = vmatprep.subr.mxu0 0.0
    %323 = vmatpush2.xpose.msra.mxu0 0.0
    %324 = vmatprep.mubr.f32.mxu0 0.0
    %325 = vmatmul.mubr.f32.gmra.mxu0 %v237
    %v326 = vpop.f32.mrf.mxu0
    %v327 = vadd.f32 0.0, %v326
    %v328 = vpop.f32.mrf.mxu0
    %329 = vmatprep.mubr.f32.mxu0 0.0
    %330 = vmatmul.mubr.f32.gmra.mxu0 %v240
    %v331 = vpop.f32.mrf.mxu0
    %v332 = vadd.f32 0.0, %v331
    %v333 = vpop.f32.mrf.mxu0
    %334 = vmatprep.mubr.f32.mxu0 0.0
    %335 = vmatmul.mubr.f32.gmra.mxu0 %v243
    %v336 = vpop.f32.mrf.mxu0
    %v337 = vadd.f32 0.0, %v336
    %v338 = vpop.f32.mrf.mxu0
    %339 = vmatprep.mubr.f32.mxu0 0.0
    %340 = vmatmul.mubr.f32.gmra.mxu0 %v246
    %v341 = vpop.f32.mrf.mxu0
    %v342 = vadd.f32 0.0, %v341
    %v343 = vpop.f32.mrf.mxu0
    %344 = vmatprep.mubr.f32.mxu0 0.0
    %345 = vmatmul.mubr.f32.gmra.mxu0 %v249
    %v346 = vpop.f32.mrf.mxu0
    %v347 = vadd.f32 0.0, %v346
    %v348 = vpop.f32.mrf.mxu0
    %349 = vmatprep.mubr.f32.mxu0 0.0
    %350 = vmatmul.mubr.f32.gmra.mxu0 %v252
    %v351 = vpop.f32.mrf.mxu0
    %v352 = vadd.f32 0.0, %v351
    %v353 = vpop.f32.mrf.mxu0
    %354 = vmatprep.mubr.f32.mxu0 0.0
    %355 = vmatmul.mubr.f32.gmra.mxu0 %v255
    %v356 = vpop.f32.mrf.mxu0
    %v357 = vadd.f32 0.0, %v356
    %v358 = vpop.f32.mrf.mxu0
    %359 = vmatprep.mubr.f32.mxu0 0.0
    %360 = vmatmul.mubr.f32.gmra.mxu0 %v258
    %v361 = vpop.f32.mrf.mxu0
    %v362 = vadd.f32 0.0, %v361
    %v363 = vpop.f32.mrf.mxu0
    %364 = vdwg.mxu0
    %v366 = vsel %vm106, %v90, 0
    %v369 = vsel %vm106, %v91, 0
    %v372 = vsel %vm106, %v92, 0
    %v375 = vsel %vm106, %v93, 0
    %v378 = vsel %vm106, %v94, 0
    %v381 = vsel %vm106, %v95, 0
    %v384 = vsel %vm106, %v96, 0
    %v387 = vsel %vm106, %v97, 0
    %389 = vmatprep.subr.mxu0 0.0
    %390 = vmatpush1.xpose.msra.mxu0 0.0
    %391 = vmatprep.subr.mxu0 0.0
    %392 = vmatpush1.xpose.msra.mxu0 0.0
    %393 = vmatprep.subr.mxu0 0.0
    %394 = vmatpush1.xpose.msra.mxu0 0.0
    %395 = vmatprep.subr.mxu0 0.0
    %396 = vmatpush1.xpose.msra.mxu0 0.0
    %397 = vmatprep.subr.mxu0 0.0
    %398 = vmatpush1.xpose.msra.mxu0 0.0
    %399 = vmatprep.subr.mxu0 0.0
    %400 = vmatpush1.xpose.msra.mxu0 0.0
    %401 = vmatprep.subr.mxu0 0.0
    %402 = vmatpush1.xpose.msra.mxu0 0.0
    %403 = vmatprep.subr.mxu0 0.0
    %404 = vmatpush1.xpose.msra.mxu0 0.0
    %405 = vmatprep.subr.mxu0 0.0
    %406 = vmatpush1.xpose.msra.mxu0 %v387
    %407 = vmatprep.subr.mxu0 0.0
    %408 = vmatpush1.xpose.msra.mxu0 %v384
    %409 = vmatprep.subr.mxu0 0.0
    %410 = vmatpush1.xpose.msra.mxu0 %v381
    %411 = vmatprep.subr.mxu0 0.0
    %412 = vmatpush1.xpose.msra.mxu0 %v378
    %413 = vmatprep.subr.mxu0 0.0
    %414 = vmatpush1.xpose.msra.mxu0 %v375
    %415 = vmatprep.subr.mxu0 0.0
    %416 = vmatpush1.xpose.msra.mxu0 %v372
    %417 = vmatprep.subr.mxu0 0.0
    %418 = vmatpush1.xpose.msra.mxu0 %v369
    %419 = vmatprep.subr.mxu0 0.0
    %420 = vmatpush1.xpose.msra.mxu0 %v366
    %421 = vmatprep.subr.mxu0 0.0
    %422 = vmatpush2.xpose.msra.mxu0 0.0
    %423 = vmatprep.subr.mxu0 0.0
    %424 = vmatpush2.xpose.msra.mxu0 0.0
    %425 = vmatprep.subr.mxu0 0.0
    %426 = vmatpush2.xpose.msra.mxu0 0.0
    %427 = vmatprep.subr.mxu0 0.0
    %428 = vmatpush2.xpose.msra.mxu0 0.0
    %429 = vmatprep.subr.mxu0 0.0
    %430 = vmatpush2.xpose.msra.mxu0 0.0
    %431 = vmatprep.subr.mxu0 0.0
    %432 = vmatpush2.xpose.msra.mxu0 0.0
    %433 = vmatprep.subr.mxu0 0.0
    %434 = vmatpush2.xpose.msra.mxu0 0.0
    %435 = vmatprep.subr.mxu0 0.0
    %436 = vmatpush2.xpose.msra.mxu0 0.0
    %437 = vmatprep.subr.mxu0 0.0
    %438 = vmatpush2.xpose.msra.mxu0 0.0
    %439 = vmatprep.subr.mxu0 0.0
    %440 = vmatpush2.xpose.msra.mxu0 0.0
    %441 = vmatprep.subr.mxu0 0.0
    %442 = vmatpush2.xpose.msra.mxu0 0.0
    %443 = vmatprep.subr.mxu0 0.0
    %444 = vmatpush2.xpose.msra.mxu0 0.0
    %445 = vmatprep.subr.mxu0 0.0
    %446 = vmatpush2.xpose.msra.mxu0 0.0
    %447 = vmatprep.subr.mxu0 0.0
    %448 = vmatpush2.xpose.msra.mxu0 0.0
    %449 = vmatprep.subr.mxu0 0.0
    %450 = vmatpush2.xpose.msra.mxu0 0.0
    %451 = vmatprep.subr.mxu0 0.0
    %452 = vmatpush2.xpose.msra.mxu0 0.0
    %453 = vmatprep.mubr.f32.mxu0 0.0
    %454 = vmatmul.mubr.f32.gmra.mxu0 %v366
    %v455 = vpop.f32.mrf.mxu0
    %v456 = vadd.f32 0.0, %v455
    %v457 = vpop.f32.mrf.mxu0
    %458 = vmatprep.mubr.f32.mxu0 0.0
    %459 = vmatmul.mubr.f32.gmra.mxu0 %v369
    %v460 = vpop.f32.mrf.mxu0
    %v461 = vadd.f32 0.0, %v460
    %v462 = vpop.f32.mrf.mxu0
    %463 = vmatprep.mubr.f32.mxu0 0.0
    %464 = vmatmul.mubr.f32.gmra.mxu0 %v372
    %v465 = vpop.f32.mrf.mxu0
    %v466 = vadd.f32 0.0, %v465
    %v467 = vpop.f32.mrf.mxu0
    %468 = vmatprep.mubr.f32.mxu0 0.0
    %469 = vmatmul.mubr.f32.gmra.mxu0 %v375
    %v470 = vpop.f32.mrf.mxu0
    %v471 = vadd.f32 0.0, %v470
    %v472 = vpop.f32.mrf.mxu0
    %473 = vmatprep.mubr.f32.mxu0 0.0
    %474 = vmatmul.mubr.f32.gmra.mxu0 %v378
    %v475 = vpop.f32.mrf.mxu0
    %v476 = vadd.f32 0.0, %v475
    %v477 = vpop.f32.mrf.mxu0
    %478 = vmatprep.mubr.f32.mxu0 0.0
    %479 = vmatmul.mubr.f32.gmra.mxu0 %v381
    %v480 = vpop.f32.mrf.mxu0
    %v481 = vadd.f32 0.0, %v480
    %v482 = vpop.f32.mrf.mxu0
    %483 = vmatprep.mubr.f32.mxu0 0.0
    %484 = vmatmul.mubr.f32.gmra.mxu0 %v384
    %v485 = vpop.f32.mrf.mxu0
    %v486 = vadd.f32 0.0, %v485
    %v487 = vpop.f32.mrf.mxu0
    %488 = vmatprep.mubr.f32.mxu0 0.0
    %489 = vmatmul.mubr.f32.gmra.mxu0 %v387
    %v490 = vpop.f32.mrf.mxu0
    %v491 = vadd.f32 0.0, %v490
    %v492 = vpop.f32.mrf.mxu0
    %493 = vdwg.mxu0
    %v495 = vsel %vm106, %v98, 0
    %v498 = vsel %vm106, %v99, 0
    %v501 = vsel %vm106, %v100, 0
    %v504 = vsel %vm106, %v101, 0
    %v507 = vsel %vm106, %v102, 0
    %v510 = vsel %vm106, %v103, 0
    %v513 = vsel %vm106, %v104, 0
    %v516 = vsel %vm106, %v105, 0
    %518 = vmatprep.subr.mxu0 0.0
    %519 = vmatpush1.xpose.msra.mxu0 0.0
    %520 = vmatprep.subr.mxu0 0.0
    %521 = vmatpush1.xpose.msra.mxu0 0.0
    %522 = vmatprep.subr.mxu0 0.0
    %523 = vmatpush1.xpose.msra.mxu0 0.0
    %524 = vmatprep.subr.mxu0 0.0
    %525 = vmatpush1.xpose.msra.mxu0 0.0
    %526 = vmatprep.subr.mxu0 0.0
    %527 = vmatpush1.xpose.msra.mxu0 0.0
    %528 = vmatprep.subr.mxu0 0.0
    %529 = vmatpush1.xpose.msra.mxu0 0.0
    %530 = vmatprep.subr.mxu0 0.0
    %531 = vmatpush1.xpose.msra.mxu0 0.0
    %532 = vmatprep.subr.mxu0 0.0
    %533 = vmatpush1.xpose.msra.mxu0 0.0
    %534 = vmatprep.subr.mxu0 0.0
    %535 = vmatpush1.xpose.msra.mxu0 %v516
    %536 = vmatprep.subr.mxu0 0.0
    %537 = vmatpush1.xpose.msra.mxu0 %v513
    %538 = vmatprep.subr.mxu0 0.0
    %539 = vmatpush1.xpose.msra.mxu0 %v510
    %540 = vmatprep.subr.mxu0 0.0
    %541 = vmatpush1.xpose.msra.mxu0 %v507
    %542 = vmatprep.subr.mxu0 0.0
    %543 = vmatpush1.xpose.msra.mxu0 %v504
    %544 = vmatprep.subr.mxu0 0.0
    %545 = vmatpush1.xpose.msra.mxu0 %v501
    %546 = vmatprep.subr.mxu0 0.0
    %547 = vmatpush1.xpose.msra.mxu0 %v498
    %548 = vmatprep.subr.mxu0 0.0
    %549 = vmatpush1.xpose.msra.mxu0 %v495
    %550 = vmatprep.subr.mxu0 0.0
    %551 = vmatpush2.xpose.msra.mxu0 0.0
    %552 = vmatprep.subr.mxu0 0.0
    %553 = vmatpush2.xpose.msra.mxu0 0.0
    %554 = vmatprep.subr.mxu0 0.0
    %555 = vmatpush2.xpose.msra.mxu0 0.0
    %556 = vmatprep.subr.mxu0 0.0
    %557 = vmatpush2.xpose.msra.mxu0 0.0
    %558 = vmatprep.subr.mxu0 0.0
    %559 = vmatpush2.xpose.msra.mxu0 0.0
    %560 = vmatprep.subr.mxu0 0.0
    %561 = vmatpush2.xpose.msra.mxu0 0.0
    %562 = vmatprep.subr.mxu0 0.0
    %563 = vmatpush2.xpose.msra.mxu0 0.0
    %564 = vmatprep.subr.mxu0 0.0
    %565 = vmatpush2.xpose.msra.mxu0 0.0
    %566 = vmatprep.subr.mxu0 0.0
    %567 = vmatpush2.xpose.msra.mxu0 0.0
    %568 = vmatprep.subr.mxu0 0.0
    %569 = vmatpush2.xpose.msra.mxu0 0.0
    %570 = vmatprep.subr.mxu0 0.0
    %571 = vmatpush2.xpose.msra.mxu0 0.0
    %572 = vmatprep.subr.mxu0 0.0
    %573 = vmatpush2.xpose.msra.mxu0 0.0
    %574 = vmatprep.subr.mxu0 0.0
    %575 = vmatpush2.xpose.msra.mxu0 0.0
    %576 = vmatprep.subr.mxu0 0.0
    %577 = vmatpush2.xpose.msra.mxu0 0.0
    %578 = vmatprep.subr.mxu0 0.0
    %579 = vmatpush2.xpose.msra.mxu0 0.0
    %580 = vmatprep.subr.mxu0 0.0
    %581 = vmatpush2.xpose.msra.mxu0 0.0
    %582 = vmatprep.mubr.f32.mxu0 0.0
    %583 = vmatmul.mubr.f32.gmra.mxu0 %v495
    %v584 = vpop.f32.mrf.mxu0
    %v585 = vadd.f32 0.0, %v584
    %v586 = vpop.f32.mrf.mxu0
    %587 = vmatprep.mubr.f32.mxu0 0.0
    %588 = vmatmul.mubr.f32.gmra.mxu0 %v498
    %v589 = vpop.f32.mrf.mxu0
    %v590 = vadd.f32 0.0, %v589
    %v591 = vpop.f32.mrf.mxu0
    %592 = vmatprep.mubr.f32.mxu0 0.0
    %593 = vmatmul.mubr.f32.gmra.mxu0 %v501
    %v594 = vpop.f32.mrf.mxu0
    %v595 = vadd.f32 0.0, %v594
    %v596 = vpop.f32.mrf.mxu0
    %597 = vmatprep.mubr.f32.mxu0 0.0
    %598 = vmatmul.mubr.f32.gmra.mxu0 %v504
    %v599 = vpop.f32.mrf.mxu0
    %v600 = vadd.f32 0.0, %v599
    %v601 = vpop.f32.mrf.mxu0
    %602 = vmatprep.mubr.f32.mxu0 0.0
    %603 = vmatmul.mubr.f32.gmra.mxu0 %v507
    %v604 = vpop.f32.mrf.mxu0
    %v605 = vadd.f32 0.0, %v604
    %v606 = vpop.f32.mrf.mxu0
    %607 = vmatprep.mubr.f32.mxu0 0.0
    %608 = vmatmul.mubr.f32.gmra.mxu0 %v510
    %v609 = vpop.f32.mrf.mxu0
    %v610 = vadd.f32 0.0, %v609
    %v611 = vpop.f32.mrf.mxu0
    %612 = vmatprep.mubr.f32.mxu0 0.0
    %613 = vmatmul.mubr.f32.gmra.mxu0 %v513
    %v614 = vpop.f32.mrf.mxu0
    %v615 = vadd.f32 0.0, %v614
    %v616 = vpop.f32.mrf.mxu0
    %617 = vmatprep.mubr.f32.mxu0 0.0
    %618 = vmatmul.mubr.f32.gmra.mxu0 %v516
    %v619 = vpop.f32.mrf.mxu0
    %v620 = vadd.f32 0.0, %v619
    %v621 = vpop.f32.mrf.mxu0
    %622 = vdwg.mxu0
    %v623 = vadd.s32 %v30, 8
    %v624 = vadd.s32 %v30, 16
    %v625 = vadd.s32 %v30, 24
    %v626 = vadd.s32 %v30, 32
    %v627 = vadd.s32 %v30, 40
    %v628 = vadd.s32 %v30, 48
    %v629 = vadd.s32 %v30, 56
    %vm630 = vcmp.eq.s32.totalorder %v30, %v51
    %vm631 = vcmp.eq.s32.totalorder %v623, %v51
    %vm632 = vcmp.eq.s32.totalorder %v624, %v51
    %vm633 = vcmp.eq.s32.totalorder %v625, %v51
    %vm634 = vcmp.eq.s32.totalorder %v626, %v51
    %vm635 = vcmp.eq.s32.totalorder %v627, %v51
    %vm636 = vcmp.eq.s32.totalorder %v628, %v51
    %vm637 = vcmp.eq.s32.totalorder %v629, %v51
    %v638 = vsel %vm630, 1, 0
    %v639 = vsel %vm631, 1, 0
    %v640 = vsel %vm632, 1, 0
    %v641 = vsel %vm633, 1, 0
    %v642 = vsel %vm634, 1, 0
    %v643 = vsel %vm635, 1, 0
    %v644 = vsel %vm636, 1, 0
    %v645 = vsel %vm637, 1, 0
    %v646 = vcvt.s32.f32 %v638
    %v647 = vcvt.s32.f32 %v639
    %v648 = vcvt.s32.f32 %v640
    %v649 = vcvt.s32.f32 %v641
    %v650 = vcvt.s32.f32 %v642
    %v651 = vcvt.s32.f32 %v643
    %v652 = vcvt.s32.f32 %v644
    %v653 = vcvt.s32.f32 %v645
    %v654 = vsub.f32 %v198, %v646
    %v655 = vsub.f32 %v203, %v647
    %v656 = vsub.f32 %v208, %v648
    %v657 = vsub.f32 %v213, %v649
    %v658 = vsub.f32 %v218, %v650
    %v659 = vsub.f32 %v223, %v651
    %v660 = vsub.f32 %v228, %v652
    %v661 = vsub.f32 %v233, %v653
    %v662 = vsub.f32 %v327, %v646
    %v663 = vsub.f32 %v332, %v647
    %v664 = vsub.f32 %v337, %v648
    %v665 = vsub.f32 %v342, %v649
    %v666 = vsub.f32 %v347, %v650
    %v667 = vsub.f32 %v352, %v651
    %v668 = vsub.f32 %v357, %v652
    %v669 = vsub.f32 %v362, %v653
    %v670 = vsub.f32 %v456, %v646
    %v671 = vsub.f32 %v461, %v647
    %v672 = vsub.f32 %v466, %v648
    %v673 = vsub.f32 %v471, %v649
    %v674 = vsub.f32 %v476, %v650
    %v675 = vsub.f32 %v481, %v651
    %v676 = vsub.f32 %v486, %v652
    %v677 = vsub.f32 %v491, %v653
    %v678 = vsub.f32 %v585, %v646
    %v679 = vsub.f32 %v590, %v647
    %v680 = vsub.f32 %v595, %v648
    %v681 = vsub.f32 %v600, %v649
    %v682 = vsub.f32 %v605, %v650
    %v683 = vsub.f32 %v610, %v651
    %v684 = vsub.f32 %v615, %v652
    %v685 = vsub.f32 %v620, %v653
    %v686 = vmul.f32 %v654, %v654
    %v687 = vmul.f32 %v655, %v655
    %v688 = vmul.f32 %v656, %v656
    %v689 = vmul.f32 %v657, %v657
    %v690 = vmul.f32 %v658, %v658
    %v691 = vmul.f32 %v659, %v659
    %v692 = vmul.f32 %v660, %v660
    %v693 = vmul.f32 %v661, %v661
    %v694 = vmul.f32 %v662, %v662
    %v695 = vmul.f32 %v663, %v663
    %v696 = vmul.f32 %v664, %v664
    %v697 = vmul.f32 %v665, %v665
    %v698 = vmul.f32 %v666, %v666
    %v699 = vmul.f32 %v667, %v667
    %v700 = vmul.f32 %v668, %v668
    %v701 = vmul.f32 %v669, %v669
    %v702 = vmul.f32 %v670, %v670
    %v703 = vmul.f32 %v671, %v671
    %v704 = vmul.f32 %v672, %v672
    %v705 = vmul.f32 %v673, %v673
    %v706 = vmul.f32 %v674, %v674
    %v707 = vmul.f32 %v675, %v675
    %v708 = vmul.f32 %v676, %v676
    %v709 = vmul.f32 %v677, %v677
    %v710 = vmul.f32 %v678, %v678
    %v711 = vmul.f32 %v679, %v679
    %v712 = vmul.f32 %v680, %v680
    %v713 = vmul.f32 %v681, %v681
    %v714 = vmul.f32 %v682, %v682
    %v715 = vmul.f32 %v683, %v683
    %v716 = vmul.f32 %v684, %v684
    %v717 = vmul.f32 %v685, %v685
    %v718 = vsel %vm106, %v686, 0.0
    %719 = vadd.xlane.f32.xlu0 %v718
    %v720 = vpop.xlane.xlu0 %719
    %v721 = vsel %vm106, %v687, 0.0
    %722 = vadd.xlane.f32.xlu0 %v721
    %v723 = vpop.xlane.xlu0 %722
    %v724 = vsel %vm106, %v688, 0.0
    %725 = vadd.xlane.f32.xlu0 %v724
    %v726 = vpop.xlane.xlu0 %725
    %v727 = vsel %vm106, %v689, 0.0
    %728 = vadd.xlane.f32.xlu0 %v727
    %v729 = vpop.xlane.xlu0 %728
    %v730 = vsel %vm106, %v690, 0.0
    %731 = vadd.xlane.f32.xlu0 %v730
    %v732 = vpop.xlane.xlu0 %731
    %v733 = vsel %vm106, %v691, 0.0
    %734 = vadd.xlane.f32.xlu0 %v733
    %v735 = vpop.xlane.xlu0 %734
    %v736 = vsel %vm106, %v692, 0.0
    %737 = vadd.xlane.f32.xlu0 %v736
    %v738 = vpop.xlane.xlu0 %737
    %v739 = vsel %vm106, %v693, 0.0
    %740 = vadd.xlane.f32.xlu0 %v739
    %v741 = vpop.xlane.xlu0 %740
    %v742 = vsel %vm106, %v694, 0.0
    %743 = vadd.xlane.f32.xlu0 %v742
    %v744 = vpop.xlane.xlu0 %743
    %v745 = vsel %vm106, %v695, 0.0
    %746 = vadd.xlane.f32.xlu0 %v745
    %v747 = vpop.xlane.xlu0 %746
    %v748 = vsel %vm106, %v696, 0.0
    %749 = vadd.xlane.f32.xlu0 %v748
    %v750 = vpop.xlane.xlu0 %749
    %v751 = vsel %vm106, %v697, 0.0
    %752 = vadd.xlane.f32.xlu0 %v751
    %v753 = vpop.xlane.xlu0 %752
    %v754 = vsel %vm106, %v698, 0.0
    %755 = vadd.xlane.f32.xlu0 %v754
    %v756 = vpop.xlane.xlu0 %755
    %v757 = vsel %vm106, %v699, 0.0
    %758 = vadd.xlane.f32.xlu0 %v757
    %v759 = vpop.xlane.xlu0 %758
    %v760 = vsel %vm106, %v700, 0.0
    %761 = vadd.xlane.f32.xlu0 %v760
    %v762 = vpop.xlane.xlu0 %761
    %v763 = vsel %vm106, %v701, 0.0
    %764 = vadd.xlane.f32.xlu0 %v763
    %v765 = vpop.xlane.xlu0 %764
    %v766 = vsel %vm106, %v702, 0.0
    %767 = vadd.xlane.f32.xlu0 %v766
    %v768 = vpop.xlane.xlu0 %767
    %v769 = vsel %vm106, %v703, 0.0
    %770 = vadd.xlane.f32.xlu0 %v769
    %v771 = vpop.xlane.xlu0 %770
    %v772 = vsel %vm106, %v704, 0.0
    %773 = vadd.xlane.f32.xlu0 %v772
    %v774 = vpop.xlane.xlu0 %773
    %v775 = vsel %vm106, %v705, 0.0
    %776 = vadd.xlane.f32.xlu0 %v775
    %v777 = vpop.xlane.xlu0 %776
    %v778 = vsel %vm106, %v706, 0.0
    %779 = vadd.xlane.f32.xlu0 %v778
    %v780 = vpop.xlane.xlu0 %779
    %v781 = vsel %vm106, %v707, 0.0
    %782 = vadd.xlane.f32.xlu0 %v781
    %v783 = vpop.xlane.xlu0 %782
    %v784 = vsel %vm106, %v708, 0.0
    %785 = vadd.xlane.f32.xlu0 %v784
    %v786 = vpop.xlane.xlu0 %785
    %v787 = vsel %vm106, %v709, 0.0
    %788 = vadd.xlane.f32.xlu0 %v787
    %v789 = vpop.xlane.xlu0 %788
    %v790 = vsel %vm106, %v710, 0.0
    %791 = vadd.xlane.f32.xlu0 %v790
    %v792 = vpop.xlane.xlu0 %791
    %v793 = vsel %vm106, %v711, 0.0
    %794 = vadd.xlane.f32.xlu0 %v793
    %v795 = vpop.xlane.xlu0 %794
    %v796 = vsel %vm106, %v712, 0.0
    %797 = vadd.xlane.f32.xlu0 %v796
    %v798 = vpop.xlane.xlu0 %797
    %v799 = vsel %vm106, %v713, 0.0
    %800 = vadd.xlane.f32.xlu0 %v799
    %v801 = vpop.xlane.xlu0 %800
    %v802 = vsel %vm106, %v714, 0.0
    %803 = vadd.xlane.f32.xlu0 %v802
    %v804 = vpop.xlane.xlu0 %803
    %v805 = vsel %vm106, %v715, 0.0
    %806 = vadd.xlane.f32.xlu0 %v805
    %v807 = vpop.xlane.xlu0 %806
    %v808 = vsel %vm106, %v716, 0.0
    %809 = vadd.xlane.f32.xlu0 %v808
    %v810 = vpop.xlane.xlu0 %809
    %v811 = vsel %vm106, %v717, 0.0
    %812 = vadd.xlane.f32.xlu0 %v811
    %v813 = vpop.xlane.xlu0 %812
    %v846 = vlaneseq
    %v847 = vshrl.u32 %v846, 7
    %v848 = vsub.s32 %v51, %v847
    %v849 = vrot.slane %v720, %v848
    %v850 = vadd.s32 %v51, 4294967288
    %v851 = vlaneseq
    %v852 = vshrl.u32 %v851, 7
    %v853 = vsub.s32 %v850, %v852
    %v854 = vrot.slane %v723, %v853
    %vm855 = vcmask 130112
    %v856 = vsel %vm855, %v854, %v849
    %v857 = vadd.s32 %v51, 4294967280
    %v858 = vlaneseq
    %v859 = vshrl.u32 %v858, 7
    %v860 = vsub.s32 %v857, %v859
    %v861 = vrot.slane %v726, %v860
    %vm862 = vcmask 195712
    %v863 = vsel %vm862, %v861, %v856
    %v864 = vadd.s32 %v51, 4294967272
    %v865 = vlaneseq
    %v866 = vshrl.u32 %v865, 7
    %v867 = vsub.s32 %v864, %v866
    %v868 = vrot.slane %v729, %v867
    %vm869 = vcmask 261312
    %v870 = vsel %vm869, %v868, %v863
    %v871 = vadd.s32 %v51, 4294967264
    %v872 = vlaneseq
    %v873 = vshrl.u32 %v872, 7
    %v874 = vsub.s32 %v871, %v873
    %v875 = vrot.slane %v732, %v874
    %vm876 = vcmask 326912
    %v877 = vsel %vm876, %v875, %v870
    %v878 = vadd.s32 %v51, 4294967256
    %v879 = vlaneseq
    %v880 = vshrl.u32 %v879, 7
    %v881 = vsub.s32 %v878, %v880
    %v882 = vrot.slane %v735, %v881
    %vm883 = vcmask 392512
    %v884 = vsel %vm883, %v882, %v877
    %v885 = vadd.s32 %v51, 4294967248
    %v886 = vlaneseq
    %v887 = vshrl.u32 %v886, 7
    %v888 = vsub.s32 %v885, %v887
    %v889 = vrot.slane %v738, %v888
    %vm890 = vcmask 458112
    %v891 = vsel %vm890, %v889, %v884
    %v892 = vadd.s32 %v51, 4294967240
    %v893 = vlaneseq
    %v894 = vshrl.u32 %v893, 7
    %v895 = vsub.s32 %v892, %v894
    %v896 = vrot.slane %v741, %v895
    %vm897 = vcmask 523712
    %v898 = vsel %vm897, %v896, %v891
    %v899 = vlaneseq
    %v900 = vshrl.u32 %v899, 7
    %v901 = vsub.s32 %v51, %v900
    %v902 = vrot.slane %v744, %v901
    %v903 = vlaneseq
    %v904 = vshrl.u32 %v903, 7
    %v905 = vsub.s32 %v850, %v904
    %v906 = vrot.slane %v747, %v905
    %v907 = vsel %vm855, %v906, %v902
    %v908 = vlaneseq
    %v909 = vshrl.u32 %v908, 7
    %v910 = vsub.s32 %v857, %v909
    %v911 = vrot.slane %v750, %v910
    %v912 = vsel %vm862, %v911, %v907
    %v913 = vlaneseq
    %v914 = vshrl.u32 %v913, 7
    %v915 = vsub.s32 %v864, %v914
    %v916 = vrot.slane %v753, %v915
    %v917 = vsel %vm869, %v916, %v912
    %v918 = vlaneseq
    %v919 = vshrl.u32 %v918, 7
    %v920 = vsub.s32 %v871, %v919
    %v921 = vrot.slane %v756, %v920
    %v922 = vsel %vm876, %v921, %v917
    %v923 = vlaneseq
    %v924 = vshrl.u32 %v923, 7
    %v925 = vsub.s32 %v878, %v924
    %v926 = vrot.slane %v759, %v925
    %v927 = vsel %vm883, %v926, %v922
    %v928 = vlaneseq
    %v929 = vshrl.u32 %v928, 7
    %v930 = vsub.s32 %v885, %v929
    %v931 = vrot.slane %v762, %v930
    %v932 = vsel %vm890, %v931, %v927
    %v933 = vlaneseq
    %v934 = vshrl.u32 %v933, 7
    %v935 = vsub.s32 %v892, %v934
    %v936 = vrot.slane %v765, %v935
    %v937 = vsel %vm897, %v936, %v932
    %v938 = vlaneseq
    %v939 = vshrl.u32 %v938, 7
    %v940 = vsub.s32 %v51, %v939
    %v941 = vrot.slane %v768, %v940
    %v942 = vlaneseq
    %v943 = vshrl.u32 %v942, 7
    %v944 = vsub.s32 %v850, %v943
    %v945 = vrot.slane %v771, %v944
    %v946 = vsel %vm855, %v945, %v941
    %v947 = vlaneseq
    %v948 = vshrl.u32 %v947, 7
    %v949 = vsub.s32 %v857, %v948
    %v950 = vrot.slane %v774, %v949
    %v951 = vsel %vm862, %v950, %v946
    %v952 = vlaneseq
    %v953 = vshrl.u32 %v952, 7
    %v954 = vsub.s32 %v864, %v953
    %v955 = vrot.slane %v777, %v954
    %v956 = vsel %vm869, %v955, %v951
    %v957 = vlaneseq
    %v958 = vshrl.u32 %v957, 7
    %v959 = vsub.s32 %v871, %v958
    %v960 = vrot.slane %v780, %v959
    %v961 = vsel %vm876, %v960, %v956
    %v962 = vlaneseq
    %v963 = vshrl.u32 %v962, 7
    %v964 = vsub.s32 %v878, %v963
    %v965 = vrot.slane %v783, %v964
    %v966 = vsel %vm883, %v965, %v961
    %v967 = vlaneseq
    %v968 = vshrl.u32 %v967, 7
    %v969 = vsub.s32 %v885, %v968
    %v970 = vrot.slane %v786, %v969
    %v971 = vsel %vm890, %v970, %v966
    %v972 = vlaneseq
    %v973 = vshrl.u32 %v972, 7
    %v974 = vsub.s32 %v892, %v973
    %v975 = vrot.slane %v789, %v974
    %v976 = vsel %vm897, %v975, %v971
    %v977 = vlaneseq
    %v978 = vshrl.u32 %v977, 7
    %v979 = vsub.s32 %v51, %v978
    %v980 = vrot.slane %v792, %v979
    %v981 = vlaneseq
    %v982 = vshrl.u32 %v981, 7
    %v983 = vsub.s32 %v850, %v982
    %v984 = vrot.slane %v795, %v983
    %v985 = vsel %vm855, %v984, %v980
    %v986 = vlaneseq
    %v987 = vshrl.u32 %v986, 7
    %v988 = vsub.s32 %v857, %v987
    %v989 = vrot.slane %v798, %v988
    %v990 = vsel %vm862, %v989, %v985
    %v991 = vlaneseq
    %v992 = vshrl.u32 %v991, 7
    %v993 = vsub.s32 %v864, %v992
    %v994 = vrot.slane %v801, %v993
    %v995 = vsel %vm869, %v994, %v990
    %v996 = vlaneseq
    %v997 = vshrl.u32 %v996, 7
    %v998 = vsub.s32 %v871, %v997
    %v999 = vrot.slane %v804, %v998
    %v1000 = vsel %vm876, %v999, %v995
    %v1001 = vlaneseq
    %v1002 = vshrl.u32 %v1001, 7
    %v1003 = vsub.s32 %v878, %v1002
    %v1004 = vrot.slane %v807, %v1003
    %v1005 = vsel %vm883, %v1004, %v1000
    %v1006 = vlaneseq
    %v1007 = vshrl.u32 %v1006, 7
    %v1008 = vsub.s32 %v885, %v1007
    %v1009 = vrot.slane %v810, %v1008
    %v1010 = vsel %vm890, %v1009, %v1005
    %v1011 = vlaneseq
    %v1012 = vshrl.u32 %v1011, 7
    %v1013 = vsub.s32 %v892, %v1012
    %v1014 = vrot.slane %v813, %v1013
    %v1015 = vsel %vm897, %v1014, %v1010
    %vm1016 = vcmask 1041409
    %v1017 = vsel %vm1016, %v937, %v898
    %vm1018 = vcmask 1042434
    %v1019 = vsel %vm1018, %v976, %v1017
    %vm1020 = vcmask 1043459
    %v1021 = vsel %vm1020, %v1015, %v1019
    %vm1023 = vcmask 519168
    %v1024 = vsel %vm1023, %v1021, 0.0
    %1025 = vadd.xlane.f32.xlu0 %v1024
    %v1026 = vpop.xlane.xlu0 %1025
    %v1027 = vrsqrt.pop %v1026
    %v1028 = vmul.f32 %v1026, %v1027
    %vm1029 = vcmp.eq.f32.partialorder %v1026, inf
    %v1030 = vsel %vm1029, %v1026, %v1028
    %vm1031 = vcmp.eq.f32.partialorder %v1026, 0.0
    %v1032 = vand.u32 %v1026, 2147483648
    %v1033 = vsel %vm1031, %v1032, %v1030
    %v1034 = vsel %vm34, %v1033, 0.0
    %v1035 = vsel %vm62, %v1034, 0.0
    %1036 = vadd.xlane.f32.xlu0 %v1035
    %v1037 = vpop.xlane.xlu0 %1036
    %v1038 = vrot.slane %v1037, 4
    %v1039 = vadd.f32 %v1037, %v1038
    %v1040 = vrot.slane %v1039, 2
    %v1041 = vadd.f32 %v1039, %v1040
    %v1042 = vrot.slane %v1041, 1
    %v1043 = vadd.f32 %v1041, %v1042
    %s1044 = vtos %v1043
    %s1045 = smul.f32 %s1044, 0.00025
    %s1046 = sadd.f32 %s73, %s1045
    %v1047 = vstv %s1046
    %1048 = vst [vmem:[#allocation5] sm:$0xff] %v1047
    // Predicated region
    $region18: #{tpu_custom_call.1} parent=1 // pred_check
      _
    $region19: #{tpu_custom_call.1} parent=1 // pred_check_branch
      %1050 = sbr.rel (0) target = $region21
    $region20: #{tpu_custom_call.1} parent=1 // pred_region
      %s1052 = ssub.s32 128, 128
      %1053 = vsyncadd [#allocation4], %s1052
      %s1055 = sshll.u32 [#allocation5], 4
      %s1056 = int_to_ptr.vmem [resolvable:$true] %s1055
      %1058 = dma.vmem_to_hbm [thread:$0]  %s1056, 128, %s3, [#allocation4]
    $region21: #{tpu_custom_call.1} parent=1 // pred_fallthru
      _
    // Predicated region
    $region22: #{tpu_custom_call.1} parent=1 // pred_check
      _
    $region23: #{tpu_custom_call.1} parent=1 // pred_check_branch
      %1060 = sbr.rel (0) target = $region25
    $region24: #{tpu_custom_call.1} parent=1 // pred_region
      %1061 = dma.done [#allocation4], 128
    $region25: #{tpu_custom_call.1} parent=1 // pred_fallthru
      _
    %1062 = vsyncpa [#allocation3], 1
    %1063 = vsyncpa [#allocation4], 1

</llo_original>
